<compile_context>
chip_gen: v7x
topology: tpu7x:2x2x1
jax: 0.10.0
libtpu: 0.0.40
codegen_flags: <defaults>
</compile_context>

<pallas_src>
import functools

import jax
import jax.numpy as jnp
from jax.experimental import pallas as pl
from jax.experimental.pallas import tpu as pltpu


_NEG_BIG = -1e30   # large finite "minus infinity" (avoids NaN on fully-masked rows)


def _round_up(x, m):
    return (x + m - 1) // m * m


def _pick_tile(dim, prefs):
    """Largest preferred tile that divides `dim`, else the full dim (allowed)."""
    for t in prefs:
        if dim % t == 0:
            return t
    return dim


def _tpu_config():
    """(is_v5e, vmem_limit_bytes) with conservative fallbacks."""
    kind = ""
    try:
        kind = jax.devices()[0].device_kind.lower()
    except Exception:
        pass
    is_v5e = ("v5 lite" in kind) or ("v5e" in kind) or ("v5lite" in kind)
    vmem_cap = 64 * 1024 * 1024           # conservative fallback (v7x-sized)
    try:
        vmem_cap = int(pltpu.get_tpu_info().vmem_capacity_bytes)
    except Exception:
        pass
    # ~60% of physical VMEM, capped: 64 MiB on 128 MiB chips, ~38 MiB on v7x.
    vmem_limit = min(int(vmem_cap * 0.6), 64 * 1024 * 1024)
    return is_v5e, vmem_limit


# --------------------------------------------------------------------------- #
# Generic tiled matmul (used for the QKV projection and the output projection)
# --------------------------------------------------------------------------- #
def _matmul_kernel(a_ref, b_ref, o_ref, acc_ref):
    @pl.when(pl.program_id(2) == 0)
    def _init():
        acc_ref[...] = jnp.zeros_like(acc_ref)

    acc_ref[...] += jnp.dot(a_ref[...], b_ref[...],
                            preferred_element_type=jnp.float32)

    @pl.when(pl.program_id(2) == pl.num_programs(2) - 1)
    def _store():
        o_ref[...] = acc_ref[...].astype(o_ref.dtype)


def _pallas_matmul(a, b, out_dtype, *, vmem_limit):
    """(M, K) @ (K, N) -> (M, N).  bf16 operands, f32 accumulation."""
    M, K = a.shape
    _, N = b.shape
    if M >= 256:
        tm, m_pad = 256, _round_up(M, 256)
    else:
        tm = m_pad = _round_up(M, 16)
    tn = _pick_tile(N, (512, 256, 128))
    tk = _pick_tile(K, (512, 256, 128))
    if m_pad != M:
        a = jnp.pad(a, ((0, m_pad - M), (0, 0)))
    grid = (m_pad // tm, N // tn, K // tk)

    out = pl.pallas_call(
        _matmul_kernel,
        out_shape=jax.ShapeDtypeStruct((m_pad, N), out_dtype),
        grid_spec=pltpu.PrefetchScalarGridSpec(
            num_scalar_prefetch=0,
            grid=grid,
            in_specs=[pl.BlockSpec((tm, tk), lambda i, j, k: (i, k)),
                      pl.BlockSpec((tk, tn), lambda i, j, k: (k, j))],
            out_specs=pl.BlockSpec((tm, tn), lambda i, j, k: (i, j)),
            scratch_shapes=[pltpu.VMEM((tm, tn), jnp.float32)]),
        compiler_params=pltpu.CompilerParams(
            dimension_semantics=("parallel", "parallel", "arbitrary"),
            vmem_limit_bytes=vmem_limit),
        cost_estimate=pl.CostEstimate(
            flops=2 * m_pad * N * K,
            transcendentals=0,
            bytes_accessed=(m_pad * K + K * N + m_pad * N) * 2),
    )(a, b)
    return out[:M] if m_pad != M else out


# --------------------------------------------------------------------------- #
# Flash attention on pre-projected q/k/v (heads batched per block)
# --------------------------------------------------------------------------- #
def _flash_kernel(*refs, has_mask, needs_kv_pad_mask, seq_len, block_k,
                  approx_recip):
    if has_mask:
        (mask_ref, q_ref, k_ref, v_ref, o_ref, m_scr, l_scr, acc_scr) = refs
    else:
        (q_ref, k_ref, v_ref, o_ref, m_scr, l_scr, acc_scr) = refs
        mask_ref = None

    kv_idx = pl.program_id(2)

    @pl.when(kv_idx == 0)
    def _init():
        m_scr[...] = jnp.full_like(m_scr, _NEG_BIG)
        l_scr[...] = jnp.zeros_like(l_scr)
        acc_scr[...] = jnp.zeros_like(acc_scr)

    q = q_ref[0]                       # (H, TQ, hd) bf16, scale already folded in
    k = k_ref[0]                       # (H, TK, hd) bf16
    v = v_ref[0]                       # (H, TK, hd) bf16

    # Batched-over-heads QK^T (contracts last dims; no transpose).
    s = jnp.einsum('hqd,hkd->hqk', q, k,
                   preferred_element_type=jnp.float32)        # (H, TQ, TK) f32

    # Mask as an additive bias, computed once per tile and amortized over heads.
    if has_mask:
        bias = jnp.where(mask_ref[0] != 0, 0.0, _NEG_BIG)     # (TQ, TK) f32
        s = s + bias[None, :, :]
    elif needs_kv_pad_mask:
        col = kv_idx * block_k + jax.lax.broadcasted_iota(
            jnp.int32, s.shape[1:], 1)                        # (TQ, TK)
        bias = jnp.where(col < seq_len, 0.0, _NEG_BIG)
        s = s + bias[None, :, :]
    # TODO(synk): block-level mask skipping (scalar-prefetched per-(qi,ki)
    # "any-kept" table + pl.when) would skip fully-masked tiles for causal masks.

    # Online softmax update.
    m_prev = m_scr[...]                                       # (H, TQ, 1)
    m_new = jnp.maximum(m_prev, jnp.max(s, axis=-1, keepdims=True))
    alpha = jnp.exp(m_prev - m_new)
    p = jnp.exp(s - m_new)                                    # (H, TQ, TK)
    l_scr[...] = alpha * l_scr[...] + jnp.sum(p, axis=-1, keepdims=True)
    pv = jnp.einsum('hqk,hkd->hqd', p.astype(v.dtype), v,
                    preferred_element_type=jnp.float32)       # (H, TQ, hd)
    acc_scr[...] = alpha * acc_scr[...] + pv
    m_scr[...] = m_new

    @pl.when(kv_idx == pl.num_programs(2) - 1)
    def _finalize():
        if approx_recip:
            inv_l = pl.reciprocal(l_scr[...], approx=True)    # EUP slot, ~free
        else:
            inv_l = 1.0 / l_scr[...]
        o_ref[0] = (acc_scr[...] * inv_l).astype(o_ref.dtype)


# --------------------------------------------------------------------------- #
# Full forward: QKV GEMM -> flash attention -> output GEMM
# --------------------------------------------------------------------------- #
def attention_pallas(x, w_qkv, w_proj, mask=None, *, head_dim=64,
                     approx_recip=True):
    """nanofm Attention forward.

    x:      (B, L, D) float
    w_qkv:  (3*D, D)  torch nn.Linear weight layout (out_features, in_features)
    w_proj: (D, D)    torch nn.Linear weight layout
    mask:   optional (B, L, L); positions where mask == 0 are masked out.
            Note: fully-masked rows yield a uniform average of V instead of the
            NaN a pure softmax would produce (deliberate divergence).
    """
    B, L, D = x.shape
    assert D % head_dim == 0
    H = D // head_dim
    scale = head_dim ** (-0.5)

    is_v5e, vmem_limit = _tpu_config()

    # Sequence tiling (flash style). v6e/v7x: 256x256 tiles match the MXU;
    # v5e keeps block_k=128.
    if L <= 256:
        l_pad = _round_up(L, 16)
        block_q = block_k = l_pad
    else:
        block_q = 256
        block_k = 128 if is_v5e else 256
        l_pad = _round_up(L, 256)
    pad = l_pad - L
    n_q, n_k = l_pad // block_q, l_pad // block_k

    x_bf = x.astype(jnp.bfloat16)
    if pad:
        x_bf = jnp.pad(x_bf, ((0, 0), (0, pad), (0, 0)))

    # ---- 1) Fused QKV projection: one full-width (B*L, D) @ (D, 3D) GEMM.
    #         Softmax scale folded into the Q columns of the weight. ----
    w_t = jnp.asarray(w_qkv, jnp.float32).T                        # (D, 3D)
    col_scale = jnp.concatenate([jnp.full((D,), scale, jnp.float32),
                                 jnp.ones((2 * D,), jnp.float32)])
    w_qkv_bf = (w_t * col_scale[None, :]).astype(jnp.bfloat16)

    qkv = _pallas_matmul(x_bf.reshape(B * l_pad, D), w_qkv_bf,
                         jnp.bfloat16, vmem_limit=vmem_limit)      # (B*l_pad, 3D)
    qkv = qkv.reshape(B, l_pad, 3, H, head_dim)
    q = qkv[:, :, 0].transpose(0, 2, 1, 3)                         # (B, H, l_pad, hd)
    k = qkv[:, :, 1].transpose(0, 2, 1, 3)
    v = qkv[:, :, 2].transpose(0, 2, 1, 3)

    # ---- 2) Flash attention over pre-projected q/k/v. ----
    has_mask = mask is not None
    operands, in_specs = [], []
    if has_mask:
        mask_i8 = (mask != 0).astype(jnp.int8)                     # 4x less HBM than f32
        if pad:
            mask_i8 = jnp.pad(mask_i8, ((0, 0), (0, pad), (0, pad)))
        operands.append(mask_i8)
        in_specs.append(pl.BlockSpec((1, block_q, block_k),
                                     lambda b, qi, ki: (b, qi, ki)))
    operands += [q, k, v]
    in_specs += [
        pl.BlockSpec((1, H, block_q, head_dim), lambda b, qi, ki: (b, 0, qi, 0)),
        pl.BlockSpec((1, H, block_k, head_dim), lambda b, qi, ki: (b, 0, ki, 0)),
        pl.BlockSpec((1, H, block_k, head_dim), lambda b, qi, ki: (b, 0, ki, 0)),
    ]

    kernel = functools.partial(
        _flash_kernel, has_mask=has_mask,
        needs_kv_pad_mask=(not has_mask) and pad > 0,
        seq_len=L, block_k=block_k, approx_recip=approx_recip)

    attn_flops = 4 * B * H * l_pad * l_pad * head_dim              # QK^T + PV
    attn_bytes = (q.size * 2                                       # q once per (b, qi)
                  + (k.size + v.size) * 2 * n_q                    # k/v re-streamed per qi
                  + B * H * l_pad * head_dim * 2                   # ctx writeback
                  + (B * l_pad * l_pad if has_mask else 0))        # int8 mask

    ctx = pl.pallas_call(
        kernel,
        out_shape=jax.ShapeDtypeStruct((B, H, l_pad, head_dim), jnp.bfloat16),
        grid_spec=pltpu.PrefetchScalarGridSpec(
            num_scalar_prefetch=0,
            grid=(B, n_q, n_k),
            in_specs=in_specs,
            out_specs=pl.BlockSpec((1, H, block_q, head_dim),
                                   lambda b, qi, ki: (b, 0, qi, 0)),
            scratch_shapes=[
                pltpu.VMEM((H, block_q, 1), jnp.float32),          # running max
                pltpu.VMEM((H, block_q, 1), jnp.float32),          # running denom
                pltpu.VMEM((H, block_q, head_dim), jnp.float32),   # running acc
            ]),
        compiler_params=pltpu.CompilerParams(
            dimension_semantics=("parallel", "parallel", "arbitrary"),
            vmem_limit_bytes=vmem_limit),
        cost_estimate=pl.CostEstimate(
            flops=attn_flops,
            transcendentals=B * H * l_pad * l_pad,
            bytes_accessed=attn_bytes),
    )(*operands)

    # ---- 3) Merge heads + output projection: one (B*L, D) @ (D, D) GEMM. ----
    ctx2d = ctx.transpose(0, 2, 1, 3).reshape(B * l_pad, D)
    w_proj_bf = jnp.asarray(w_proj, jnp.float32).T.astype(jnp.bfloat16)
    out = _pallas_matmul(ctx2d, w_proj_bf, x.dtype, vmem_limit=vmem_limit)
    out = out.reshape(B, l_pad, D)
    return out[:, :L, :] if pad else out


def attention_ref(x, w_qkv, w_proj, mask=None, *, head_dim=64):
    """Pure-JAX (f32) reference mirroring the PyTorch forward exactly."""
    B, L, D = x.shape
    H = D // head_dim
    scale = head_dim ** (-0.5)
    qkv = jnp.einsum('bld,ed->ble', x, w_qkv)               # Linear (no bias)
    q, k, v = jnp.split(qkv, 3, axis=-1)

    def to_heads(t):
        return t.reshape(B, L, H, head_dim).transpose(0, 2, 1, 3)

    q, k, v = to_heads(q), to_heads(k), to_heads(v)
    attn = jnp.einsum('bhid,bhjd->bhij', q, k) * scale
    if mask is not None:
        attn = jnp.where(mask[:, None, :, :] == 0, -jnp.inf, attn)
    attn = jax.nn.softmax(attn, axis=-1)
    o = jnp.einsum('bhij,bhjd->bhid', attn, v)
    o = o.transpose(0, 2, 1, 3).reshape(B, L, D)
    return jnp.einsum('bld,ed->ble', o, w_proj)


if __name__ == "__main__":
    B, L, head_dim = 2, 8, 64
    num_heads = 2
    D = num_heads * head_dim          # 128

    key = jax.random.PRNGKey(0)
    kx, kqkv, kproj = jax.random.split(key, 3)

    x = jax.random.normal(kx, (B, L, D), dtype=jnp.float32)
    # Deterministic parameter init (qkv_bias=False, proj_bias=False).
    w_qkv = jax.random.normal(kqkv, (3 * D, D), dtype=jnp.float32) * (D ** -0.5)
    w_proj = jax.random.normal(kproj, (D, D), dtype=jnp.float32) * (D ** -0.5)

    # Example mask: causal (1 = keep, 0 = masked), shape (B, L, L).
    causal = jnp.tril(jnp.ones((L, L), dtype=jnp.float32))
    mask = jnp.broadcast_to(causal, (B, L, L))

    out = jax.block_until_ready(
        attention_pallas(x, w_qkv, w_proj, mask, head_dim=head_dim))
    ref = attention_ref(x, w_qkv, w_proj, mask, head_dim=head_dim)
    assert out.shape == (B, L, D)
    # bf16 matmul operands (f32 accumulation) -> loosened tolerance vs f32 reference.
    assert jnp.allclose(out, ref, atol=5e-2, rtol=5e-2), "mismatch vs reference (masked)"

    # mask=None path (kernel variant with no mask input at all).
    out_nm = jax.block_until_ready(
        attention_pallas(x, w_qkv, w_proj, None, head_dim=head_dim))
    ref_nm = attention_ref(x, w_qkv, w_proj, None, head_dim=head_dim)
    assert jnp.allclose(out_nm, ref_nm, atol=5e-2, rtol=5e-2), "mismatch vs reference (no mask)"

    print("KERNEL_OK")
</pallas_src>

<mosaic_0001>
module attributes {stable_mosaic.version = 11 : i64} {
  func.func @_matmul_kernel(%arg0: i32, %arg1: i32, %arg2: i32, %arg3: memref<32x128xbf16, #tpu.memory_space<vmem>>, %arg4: memref<128x128xbf16, #tpu.memory_space<vmem>>, %arg5: memref<32x128xbf16, #tpu.memory_space<vmem>>, %arg6: memref<32x128xf32, #tpu.memory_space<vmem>>) attributes {dimension_semantics = [#tpu.dimension_semantics<parallel>, #tpu.dimension_semantics<parallel>, #tpu.dimension_semantics<arbitrary>], iteration_bounds = array<i64: 1, 3, 1>, scalar_prefetch = 0 : i64, scratch_operands = 1 : i64, tpu.core_type = #tpu.core_type<tc>, window_params = [{transform_indices = @transform_0, window_bounds = array<i64: 32, 128>}, {transform_indices = @transform_1, window_bounds = array<i64: 128, 128>}, {transform_indices = @transform_2, window_bounds = array<i64: 32, 128>}]} {
    %c0_i32 = arith.constant 0 : i32
    %0 = arith.cmpi eq, %arg2, %c0_i32 : i32
    %1 = arith.extui %0 : i1 to i32
    %c0_i32_0 = arith.constant 0 : i32
    %2 = arith.cmpi ne, %1, %c0_i32_0 : i32
    scf.if %2 {
      %cst_10 = arith.constant 0.000000e+00 : f32
      %12 = vector.broadcast %cst_10 : f32 to vector<32x128xf32>
      %c0_11 = arith.constant 0 : index
      %c0_12 = arith.constant 0 : index
      %13 = vector.load %arg6[%c0_11, %c0_12] : memref<32x128xf32, #tpu.memory_space<vmem>>, vector<32x128xf32>
      tpu.vector_store %arg6[%c0_11, %c0_12], %12 {strides = array<i32>} : memref<32x128xf32, #tpu.memory_space<vmem>>, vector<32x128xf32>,
    } else {
    }
    %c0 = arith.constant 0 : index
    %c0_1 = arith.constant 0 : index
    %3 = vector.load %arg6[%c0, %c0_1] : memref<32x128xf32, #tpu.memory_space<vmem>>, vector<32x128xf32>
    %c0_2 = arith.constant 0 : index
    %c0_3 = arith.constant 0 : index
    %4 = vector.load %arg3[%c0_2, %c0_3] : memref<32x128xbf16, #tpu.memory_space<vmem>>, vector<32x128xbf16>
    %c0_4 = arith.constant 0 : index
    %c0_5 = arith.constant 0 : index
    %5 = vector.load %arg4[%c0_4, %c0_5] : memref<128x128xbf16, #tpu.memory_space<vmem>>, vector<128x128xbf16>
    %cst = arith.constant dense<0.000000e+00> : vector<32x128xf32>
    %6 = tpu.matmul %4, %5, %cst {dimension_numbers = #tpu.dot_dimension_numbers<[1], [0], [0], [1], [0, 0, 1, 1], [], []>} : vector<32x128xbf16>, vector<128x128xbf16>, vector<32x128xf32> -> vector<32x128xf32>
    %7 = arith.addf %3, %6 : vector<32x128xf32>
    %c0_6 = arith.constant 0 : index
    %c0_7 = arith.constant 0 : index
    %8 = vector.load %arg6[%c0_6, %c0_7] : memref<32x128xf32, #tpu.memory_space<vmem>>, vector<32x128xf32>
    tpu.vector_store %arg6[%c0_6, %c0_7], %7 {strides = array<i32>} : memref<32x128xf32, #tpu.memory_space<vmem>>, vector<32x128xf32>,
    %c0_i32_8 = arith.constant 0 : i32
    %9 = arith.cmpi eq, %arg2, %c0_i32_8 : i32
    %10 = arith.extui %9 : i1 to i32
    %c0_i32_9 = arith.constant 0 : i32
    %11 = arith.cmpi ne, %10, %c0_i32_9 : i32
    scf.if %11 {
      %c0_10 = arith.constant 0 : index
      %c0_11 = arith.constant 0 : index
      %12 = vector.load %arg6[%c0_10, %c0_11] : memref<32x128xf32, #tpu.memory_space<vmem>>, vector<32x128xf32>
      %13 = arith.truncf %12 : vector<32x128xf32> to vector<32x128xbf16>
      %c0_12 = arith.constant 0 : index
      %c0_13 = arith.constant 0 : index
      %14 = vector.load %arg5[%c0_12, %c0_13] : memref<32x128xbf16, #tpu.memory_space<vmem>>, vector<32x128xbf16>
      tpu.vector_store %arg5[%c0_12, %c0_13], %13 {strides = array<i32>} : memref<32x128xbf16, #tpu.memory_space<vmem>>, vector<32x128xbf16>,
    } else {
    }
    return
  }
  func.func @transform_0(%arg0: i32, %arg1: i32, %arg2: i32) -> (i32, i32) {
    %c0_i32 = arith.constant 0 : i32
    return %arg0, %arg2 : i32, i32
  }
  func.func @transform_1(%arg0: i32, %arg1: i32, %arg2: i32) -> (i32, i32) {
    %c0_i32 = arith.constant 0 : i32
    return %arg2, %arg1 : i32, i32
  }
  func.func @transform_2(%arg0: i32, %arg1: i32, %arg2: i32) -> (i32, i32) {
    %c0_i32 = arith.constant 0 : i32
    return %arg0, %arg1 : i32, i32
  }
}

</mosaic_0001>

<llo_original>
// kernel: tpu_custom_call.1
$region0: #{tpu_custom_call.1}
  #allocation0 [shape = 'u32[]', space=smem, size = 0x4, offset = 0x4, fixed_abs, tag = 'smem constant byte address 0x4 - core index']
  #allocation1 [shape = 'u32[144,128]{1,0:T(1,128)}', space=vmem, size = 0x12000, scoped, tag = 'internal scratch']
  #allocation2 [shape = 'f32[32,128]{1,0:T(8,128)}', space=vmem, size = 0x4000, scoped, tag = 'scratch operand']
  %s0 = inlined_call_operand.hbm [shape: bf16[32,128], index: 0, kind: input, shape index: {}]
  %s1 = inlined_call_operand.hbm [shape: bf16[128,384], index: 1, kind: input, shape index: {}]
  %s2 = inlined_call_operand.hbm [shape: bf16[32,384], index: 2, kind: output, shape index: {}]
  %s3 = sld [smem:[#allocation0]]
  $region57: #{tpu_custom_call.1} parent=0
    _
  %s5 = ssub.s32 1, %s3
  %s6 = scalar_select 0, %s5, %s3
  $region1: #{tpu_custom_call.1} parent=0
    #allocation3 [shape = 'u8[8192]{0}', space=vmem, size = 0x2000, scoped, tag = 'input window, operand 0, single buffered']
    #allocation4 [shape = 's32[2]{0}', space=sflag, size = 0x8, scoped, tag = 'scoped memory for tpu_custom_call.1']
    #allocation5 [shape = 's32[2]{0}', space=sflag, size = 0x8, scoped, tag = 'scoped memory for tpu_custom_call.1']
    #allocation6 [shape = 'u8[65536]{0}', space=vmem, size = 0x10000, scoped, tag = 'input window, operand 1']
    #allocation7 [shape = 's32[2]{0}', space=sflag, size = 0x8, scoped, tag = 'scoped memory for tpu_custom_call.1']
    #allocation8 [shape = 'u8[16384]{0}', space=vmem, size = 0x4000, scoped, tag = 'output window, operand 0']
    %7 = vsyncpa [#allocation4], 0
    %8 = vsyncpa [#allocation7], 0
    %s9 = scalar_lea.sflag [#allocation7], 1
    %10 = vsyncpa %s9, 0
    %11 = vsyncpa [#allocation5], 0
    %s12 = scalar_lea.sflag [#allocation5], 1
    %13 = vsyncpa %s12, 0
    loop: start=0, step=1, limit=5
    $region2: #{tpu_custom_call.1} parent=1 // loop_pre_header
      _
    $region3: #{tpu_custom_call.1} parent=1 // loop_header
      %s15 = sphi 0, %s19
      %p16 = scmp.ge.s32.totalorder %s15, 5
      %s22 = sphi 0, %s41
      %s23 = sphi 0, %s37
      %s24 = sphi 0, %s33
      %s25 = sphi 0, %s22
      %s26 = sphi 0, %s23
      %s27 = sphi 0, %s24
      %s28 = sphi 0, %s25
      %s29 = sphi 0, %s26
      %s30 = sphi 0, %s27
      %s46 = sphi 0, %s48
      %s49 = sphi 0, %s46
      %s50 = sphi 0, %s49
      %s66 = sphi 0, %s50
      %s74 = sphi 0, %s76
      %s77 = sphi 0, %s74
      %s78 = sphi 0, %s77
      %s94 = sphi 0, %s78
      %s102 = sphi 0, %s104
      %s105 = sphi 0, %s102
      %s106 = sphi 0, %s105
      %s122 = sphi 0, %s106
    $region4: #{tpu_custom_call.1} parent=1 // loop_header_branch
      %18 = sbr.rel (%p16) target = $region8
    $region5: #{tpu_custom_call.1} parent=1 // loop_body
      %s20 = ssub.s32 %s15, 1
      %s21 = ssub.s32 %s15, 2
      %s31 = sadd.s32 1, %s24
      %p32 = scmp.ge.s32.totalorder %s31, 1
      %s33 = scalar_select %p32, 0, %s31
      %s34 = sadd.s32 1, %s23
      %s35 = scalar_select %p32, %s34, %s23
      %p36 = scmp.ge.s32.totalorder %s35, 3
      %s37 = scalar_select %p36, 0, %s35
      %s38 = sadd.s32 1, %s22
      %s39 = scalar_select %p36, %s38, %s22
      %p40 = scmp.ge.s32.totalorder %s39, 1
      %s41 = scalar_select %p40, 0, %s39
      %s42 = ssub.s32 %s22, %s41
      %s43 = ssub.s32 %s24, %s33
      %s44 = sor.u32 %s42, %s43
      %p45 = scmp.eq.s32.totalorder %s44, 0
      %s47 = sadd.s32 %s46, 1
      %s48 = scalar_select %p45, %s46, %s47
      %p51 = pneg %p45
      %p52 = scmp.eq.s32.totalorder %s15, 2
      %p53 = por %p51, %p52
      %p54 = scmp.ne.s32.totalorder %s46, %s49
      %p55 = scmp.eq.s32.totalorder %s15, 0
      %p56 = por %p54, %p55
      %p57 = scmp.ne.s32.totalorder %s46, %s49
      %p58 = scmp.eq.s32.totalorder %s20, 2
      %p59 = por %p57, %p58
      %p60 = scmp.ne.s32.totalorder %s49, %s50
      %p61 = scmp.eq.s32.totalorder %s20, 0
      %p62 = por %p60, %p61
      %p63 = scmp.ne.s32.totalorder %s49, %s50
      %p64 = scmp.eq.s32.totalorder %s21, 2
      %p65 = por %p63, %p64
      %p67 = scmp.ne.s32.totalorder %s50, %s66
      %p68 = scmp.eq.s32.totalorder %s21, 0
      %p69 = por %p67, %p68
      %s70 = ssub.s32 %s24, %s33
      %s71 = ssub.s32 %s23, %s37
      %s72 = sor.u32 %s70, %s71
      %p73 = scmp.eq.s32.totalorder %s72, 0
      %s75 = sadd.s32 %s74, 1
      %s76 = scalar_select %p73, %s74, %s75
      %p79 = pneg %p73
      %p80 = scmp.eq.s32.totalorder %s15, 2
      %p81 = por %p79, %p80
      %p82 = scmp.ne.s32.totalorder %s74, %s77
      %p83 = scmp.eq.s32.totalorder %s15, 0
      %p84 = por %p82, %p83
      %p85 = scmp.ne.s32.totalorder %s74, %s77
      %p86 = scmp.eq.s32.totalorder %s20, 2
      %p87 = por %p85, %p86
      %p88 = scmp.ne.s32.totalorder %s77, %s78
      %p89 = scmp.eq.s32.totalorder %s20, 0
      %p90 = por %p88, %p89
      %p91 = scmp.ne.s32.totalorder %s77, %s78
      %p92 = scmp.eq.s32.totalorder %s21, 2
      %p93 = por %p91, %p92
      %p95 = scmp.ne.s32.totalorder %s78, %s94
      %p96 = scmp.eq.s32.totalorder %s21, 0
      %p97 = por %p95, %p96
      %s98 = ssub.s32 %s22, %s41
      %s99 = ssub.s32 %s23, %s37
      %s100 = sor.u32 %s98, %s99
      %p101 = scmp.eq.s32.totalorder %s100, 0
      %s103 = sadd.s32 %s102, 1
      %s104 = scalar_select %p101, %s102, %s103
      %p107 = pneg %p101
      %p108 = scmp.eq.s32.totalorder %s15, 2
      %p109 = por %p107, %p108
      %p110 = scmp.ne.s32.totalorder %s102, %s105
      %p111 = scmp.eq.s32.totalorder %s15, 0
      %p112 = por %p110, %p111
      %p113 = scmp.ne.s32.totalorder %s102, %s105
      %p114 = scmp.eq.s32.totalorder %s20, 2
      %p115 = por %p113, %p114
      %p116 = scmp.ne.s32.totalorder %s105, %s106
      %p117 = scmp.eq.s32.totalorder %s20, 0
      %p118 = por %p116, %p117
      %p119 = scmp.ne.s32.totalorder %s105, %s106
      %p120 = scmp.eq.s32.totalorder %s21, 2
      %p121 = por %p119, %p120
      %p123 = scmp.ne.s32.totalorder %s106, %s122
      %p124 = scmp.eq.s32.totalorder %s21, 0
      %p125 = por %p123, %p124
      %p126 = scmp.le.s32.totalorder 1, %s15
      %p127 = scmp.lt.s32.totalorder %s15, 4
      %p128 = pnand %p126, %p127
      %p129 = pneg %p128
      // Predicated region
      $region9: #{tpu_custom_call.1} parent=5 // pred_check
        _
      $region10: #{tpu_custom_call.1} parent=5 // pred_check_branch
        %131 = sbr.rel (%p128) target = $region12
      $region11: #{tpu_custom_call.1} parent=5 // pred_region
        %s132 = ssub.s32 %s15, 1
        // Predicated region
        $region13: #{tpu_custom_call.1} parent=11 // pred_check
          %p133 = pneg %p62
        $region14: #{tpu_custom_call.1} parent=11 // pred_check_branch
          %135 = sbr.rel (%p133) target = $region16
        $region15: #{tpu_custom_call.1} parent=11 // pred_region
          %s136 = smul.u32 4, %s25
          %s138 = ssub.s32 256, 256
          %139 = vsyncadd [#allocation4], %s138
          %s140 = sadd.s32 %s27, %s136
          %s141 = smul.addr %s140, 64
          %s142 = scalar_lea.hbm %s0, %s141
          %s143 = sshll.u32 [#allocation3], 4
          %s144 = int_to_ptr.vmem [resolvable:$true] %s143
          %149 = dma.hbm_to_vmem [thread:$0]  %s142, 256, %s144, [#allocation4], 64, 64, 4
        $region16: #{tpu_custom_call.1} parent=11 // pred_fallthru
          _
      $region12: #{tpu_custom_call.1} parent=5 // pred_fallthru
        _
      %p150 = scmp.lt.s32.totalorder %s15, 3
      // Predicated region
      $region17: #{tpu_custom_call.1} parent=5 // pred_check
        %p151 = pneg %p150
      $region18: #{tpu_custom_call.1} parent=5 // pred_check_branch
        %153 = sbr.rel (%p151) target = $region20
      $region19: #{tpu_custom_call.1} parent=5 // pred_region
        // Predicated region
        $region21: #{tpu_custom_call.1} parent=19 // pred_check
          %p154 = pneg %p84
        $region22: #{tpu_custom_call.1} parent=19 // pred_check_branch
          %156 = sbr.rel (%p154) target = $region24
        $region23: #{tpu_custom_call.1} parent=19 // pred_region
          %s157 = sand.u32 %s74, 1
          %s158 = scalar_lea.sflag [#allocation7], %s157
          %s159 = sand.u32 %s74, 1
          %s160 = smul.addr %s159, 64
          %s161 = scalar_lea.vmem [#allocation6], %s160
          %s162 = smul.u32 16, %s24
          %s164 = ssub.s32 1024, 1024
          %165 = vsyncadd %s158, %s164
          %s166 = smul.addr %s162, 3
          %s167 = sadd.s32 %s23, %s166
          %s168 = smul.addr %s167, 64
          %s169 = scalar_lea.hbm %s1, %s168
          %s170 = sshll.u32 %s161, 4
          %s171 = int_to_ptr.vmem [resolvable:$true] %s170
          %176 = dma.hbm_to_vmem [thread:$0]  %s169, 1024, %s171, %s158, 192, 64, 4
        $region24: #{tpu_custom_call.1} parent=19 // pred_fallthru
          _
      $region20: #{tpu_custom_call.1} parent=5 // pred_fallthru
        _
      %p177 = scmp.le.s32.totalorder 1, %s15
      %p178 = scmp.lt.s32.totalorder %s15, 4
      %p179 = pnand %p177, %p178
      %p180 = pneg %p179
      // Predicated region
      $region25: #{tpu_custom_call.1} parent=5 // pred_check
        _
      $region26: #{tpu_custom_call.1} parent=5 // pred_check_branch
        %182 = sbr.rel (%p179) target = $region28
      $region27: #{tpu_custom_call.1} parent=5 // pred_region
        %s183 = ssub.s32 %s15, 1
        // Predicated region
        $region29: #{tpu_custom_call.1} parent=27 // pred_check
          %p184 = pneg %p62
        $region30: #{tpu_custom_call.1} parent=27 // pred_check_branch
          %186 = sbr.rel (%p184) target = $region32
        $region31: #{tpu_custom_call.1} parent=27 // pred_region
          %187 = dma.done [#allocation4], 256
        $region32: #{tpu_custom_call.1} parent=27 // pred_fallthru
          _
        %s188 = sand.u32 %s77, 1
        %s189 = scalar_lea.sflag [#allocation7], %s188
        %s190 = sand.u32 %s77, 1
        %s191 = smul.addr %s190, 64
        %s192 = scalar_lea.vmem [#allocation6], %s191
        // Predicated region
        $region33: #{tpu_custom_call.1} parent=27 // pred_check
          %p193 = pneg %p90
        $region34: #{tpu_custom_call.1} parent=27 // pred_check_branch
          %195 = sbr.rel (%p193) target = $region36
        $region35: #{tpu_custom_call.1} parent=27 // pred_region
          %196 = dma.done %s189, 1024
        $region36: #{tpu_custom_call.1} parent=27 // pred_fallthru
          _
        %p197 = pneg %p62
        %p198 = pneg %p59
        %s199 = sand.u32 %s77, 1
        %s200 = scalar_lea.sflag [#allocation7], %s199
        %s201 = sand.u32 %s77, 1
        %s202 = smul.addr %s201, 64
        %s203 = scalar_lea.vmem [#allocation6], %s202
        %p204 = pneg %p90
        %p205 = pneg %p87
        %p206 = pneg %p118
        %p207 = pneg %p115
        %s208 = sand.u32 %s105, 1
        %s209 = scalar_lea.sflag [#allocation5], %s208
        %s210 = sand.u32 %s105, 1
        %s211 = smul.addr %s210, 16
        %s212 = scalar_lea.vmem [#allocation8], %s211
        %s213 = smul.u32 4, %s25
        %s214 = smul.u32 16, %s27
        %s215 = smul.u32 4, %s25
        %p217 = scmp.eq.s32.totalorder %s27, 0
        // Predicated region
        $region37: #{tpu_custom_call.1} parent=27 // pred_check
          %p218 = pneg %p217
        $region38: #{tpu_custom_call.1} parent=27 // pred_check_branch
          %220 = sbr.rel (%p218) target = $region40
        $region39: #{tpu_custom_call.1} parent=27 // pred_region
          %221 = vst [vmem:[#allocation2] sm:$0xff] 0.0
          %222 = vst [vmem:[#allocation2 + $0x8] sm:$0xff] 0.0
          %223 = vst [vmem:[#allocation2 + $0x10] sm:$0xff] 0.0
          %224 = vst [vmem:[#allocation2 + $0x18] sm:$0xff] 0.0
        $region40: #{tpu_custom_call.1} parent=27 // pred_fallthru
          _
        %v225 = vld [vmem:[#allocation2] sm:$0xff]
        %v226 = vld [vmem:[#allocation2 + $0x8] sm:$0xff]
        %v227 = vld [vmem:[#allocation2 + $0x10] sm:$0xff]
        %v228 = vld [vmem:[#allocation2 + $0x18] sm:$0xff]
        %v229 = vld [vmem:[#allocation3] sm:$0xf]
        %v230 = vld [vmem:[#allocation3 + $0x4] sm:$0xf]
        %v231 = vld [vmem:[#allocation3 + $0x8] sm:$0xf]
        %v232 = vld [vmem:[#allocation3 + $0xc] sm:$0xf]
        %v233 = vld [vmem:[%s192] sm:$0xf]
        %v234 = vld [vmem:[%s192 + $0x4] sm:$0xf]
        %v235 = vld [vmem:[%s192 + $0x8] sm:$0xf]
        %v236 = vld [vmem:[%s192 + $0xc] sm:$0xf]
        %v237 = vld [vmem:[%s192 + $0x10] sm:$0xf]
        %v238 = vld [vmem:[%s192 + $0x14] sm:$0xf]
        %v239 = vld [vmem:[%s192 + $0x18] sm:$0xf]
        %v240 = vld [vmem:[%s192 + $0x1c] sm:$0xf]
        %v241 = vld [vmem:[%s192 + $0x20] sm:$0xf]
        %v242 = vld [vmem:[%s192 + $0x24] sm:$0xf]
        %v243 = vld [vmem:[%s192 + $0x28] sm:$0xf]
        %v244 = vld [vmem:[%s192 + $0x2c] sm:$0xf]
        %v245 = vld [vmem:[%s192 + $0x30] sm:$0xf]
        %v246 = vld [vmem:[%s192 + $0x34] sm:$0xf]
        %v247 = vld [vmem:[%s192 + $0x38] sm:$0xf]
        %v248 = vld [vmem:[%s192 + $0x3c] sm:$0xf]
        %v253 = vunpack.c.l.b16 %v229
        %v254 = vunpack.c.l.b16 %v230
        %v255 = vunpack.c.l.b16 %v231
        %v256 = vunpack.c.l.b16 %v232
        %v257 = vpack.c.b16 %v254, %v253
        %v258 = vpack.c.b16 %v256, %v255
        %v277 = vunpack.c.l.b16 %v233
        %v278 = vunpack.c.l.b16 %v234
        %v279 = vunpack.c.l.b16 %v235
        %v280 = vunpack.c.l.b16 %v236
        %v281 = vunpack.c.l.b16 %v237
        %v282 = vunpack.c.l.b16 %v238
        %v283 = vunpack.c.l.b16 %v239
        %v284 = vunpack.c.l.b16 %v240
        %v285 = vunpack.c.l.b16 %v241
        %v286 = vunpack.c.l.b16 %v242
        %v287 = vunpack.c.l.b16 %v243
        %v288 = vunpack.c.l.b16 %v244
        %v289 = vunpack.c.l.b16 %v245
        %v290 = vunpack.c.l.b16 %v246
        %v291 = vunpack.c.l.b16 %v247
        %v292 = vunpack.c.l.b16 %v248
        %v293 = vpack.c.b16 %v278, %v277
        %v294 = vpack.c.b16 %v280, %v279
        %v295 = vpack.c.b16 %v282, %v281
        %v296 = vpack.c.b16 %v284, %v283
        %v297 = vpack.c.b16 %v286, %v285
        %v298 = vpack.c.b16 %v288, %v287
        %v299 = vpack.c.b16 %v290, %v289
        %v300 = vpack.c.b16 %v292, %v291
        %309 = vmatprep.subr.bf16.mxu0 0
        %310 = vmatpush1.bf16.msra.mxu0 %v293
        %311 = vmatprep.subr.bf16.mxu0 0
        %312 = vmatpush1.bf16.msra.mxu0 %v294
        %313 = vmatprep.subr.bf16.mxu0 0
        %314 = vmatpush1.bf16.msra.mxu0 %v295
        %315 = vmatprep.subr.bf16.mxu0 0
        %316 = vmatpush1.bf16.msra.mxu0 %v296
        %317 = vmatprep.subr.bf16.mxu0 0
        %318 = vmatpush1.bf16.msra.mxu0 %v297
        %319 = vmatprep.subr.bf16.mxu0 0
        %320 = vmatpush1.bf16.msra.mxu0 %v298
        %321 = vmatprep.subr.bf16.mxu0 0
        %322 = vmatpush1.bf16.msra.mxu0 %v299
        %323 = vmatprep.subr.bf16.mxu0 0
        %324 = vmatpush1.bf16.msra.mxu0 %v300
        %325 = vmatprep.subr.bf16.mxu0 0
        %326 = vmatpush1.bf16.msra.mxu0 0
        %327 = vmatprep.subr.bf16.mxu0 0
        %328 = vmatpush1.bf16.msra.mxu0 0
        %329 = vmatprep.subr.bf16.mxu0 0
        %330 = vmatpush1.bf16.msra.mxu0 0
        %331 = vmatprep.subr.bf16.mxu0 0
        %332 = vmatpush1.bf16.msra.mxu0 0
        %333 = vmatprep.subr.bf16.mxu0 0
        %334 = vmatpush1.bf16.msra.mxu0 0
        %335 = vmatprep.subr.bf16.mxu0 0
        %336 = vmatpush1.bf16.msra.mxu0 0
        %337 = vmatprep.subr.bf16.mxu0 0
        %338 = vmatpush1.bf16.msra.mxu0 0
        %339 = vmatprep.subr.bf16.mxu0 0
        %340 = vmatpush1.bf16.msra.mxu0 0
        %341 = vmatprep.mubr.bf16.mxu0 0
        %342 = vmatmul.mubr.bf16.gmra.mrb[0].mxu0 %v257
        %v343 = vpop.f32.mrb[0].mxu0
        %v344 = vadd.f32 0.0, %v343
        %v345 = vpop.f32.mrb[0].mxu0
        %v346 = vpop.f32.mrb[0].mxu0
        %v347 = vadd.f32 0.0, %v346
        %v348 = vpop.f32.mrb[0].mxu0
        %349 = vmatprep.mubr.bf16.mxu0 0
        %350 = vmatmul.mubr.bf16.gmra.mrb[0].mxu0 %v258
        %v351 = vpop.f32.mrb[0].mxu0
        %v352 = vadd.f32 0.0, %v351
        %v353 = vpop.f32.mrb[0].mxu0
        %v354 = vpop.f32.mrb[0].mxu0
        %v355 = vadd.f32 0.0, %v354
        %v356 = vpop.f32.mrb[0].mxu0
        %357 = vdwg.mxu0
        %v358 = vadd.f32 %v225, %v344
        %v359 = vadd.f32 %v226, %v347
        %v360 = vadd.f32 %v227, %v352
        %v361 = vadd.f32 %v228, %v355
        %362 = vst [vmem:[#allocation2] sm:$0xff] %v358
        %363 = vst [vmem:[#allocation2 + $0x8] sm:$0xff] %v359
        %364 = vst [vmem:[#allocation2 + $0x10] sm:$0xff] %v360
        %365 = vst [vmem:[#allocation2 + $0x18] sm:$0xff] %v361
        // Predicated region
        $region41: #{tpu_custom_call.1} parent=27 // pred_check
          %p366 = pneg %p217
        $region42: #{tpu_custom_call.1} parent=27 // pred_check_branch
          %368 = sbr.rel (%p366) target = $region44
        $region43: #{tpu_custom_call.1} parent=27 // pred_region
          %v369 = vld [vmem:[#allocation2] sm:$0xff]
          %v370 = vld [vmem:[#allocation2 + $0x8] sm:$0xff]
          %v371 = vld [vmem:[#allocation2 + $0x10] sm:$0xff]
          %v372 = vld [vmem:[#allocation2 + $0x18] sm:$0xff]
          %v373 = vpack.c.bf16 %v370, %v369
          %v374 = vpack.c.bf16 %v372, %v371
          %v377 = vunpack.c.l.b16 %v373
          %v378 = vunpack.c.h.b16 %v373
          %v379 = vunpack.c.l.b16 %v374
          %v380 = vunpack.c.h.b16 %v374
          %v381 = vpack.c.b16 %v377, %v377
          %v382 = vpack.c.b16 %v378, %v378
          %v383 = vpack.c.b16 %v379, %v379
          %v384 = vpack.c.b16 %v380, %v380
          %389 = vst [vmem:[%s212] sm:$0xf] %v381
          %390 = vst [vmem:[%s212 + $0x4] sm:$0xf] %v382
          %391 = vst [vmem:[%s212 + $0x8] sm:$0xf] %v383
          %392 = vst [vmem:[%s212 + $0xc] sm:$0xf] %v384
        $region44: #{tpu_custom_call.1} parent=27 // pred_fallthru
          _
        %s393 = sand.u32 %s105, 1
        %s394 = scalar_lea.sflag [#allocation5], %s393
        %s395 = sand.u32 %s105, 1
        %s396 = smul.addr %s395, 16
        %s397 = scalar_lea.vmem [#allocation8], %s396
        // Predicated region
        $region45: #{tpu_custom_call.1} parent=27 // pred_check
          %p398 = pneg %p115
        $region46: #{tpu_custom_call.1} parent=27 // pred_check_branch
          %400 = sbr.rel (%p398) target = $region48
        $region47: #{tpu_custom_call.1} parent=27 // pred_region
          %s401 = smul.u32 4, %s25
          %s403 = ssub.s32 256, 256
          %404 = vsyncadd %s394, %s403
          %s405 = smul.addr %s401, 3
          %s406 = sadd.s32 %s26, %s405
          %s407 = smul.addr %s406, 64
          %s408 = scalar_lea.hbm %s2, %s407
          %s409 = sshll.u32 %s397, 4
          %s410 = int_to_ptr.vmem [resolvable:$true] %s409
          %415 = dma.vmem_to_hbm [thread:$0]  %s410, 256, %s408, %s394, 64, 192, 4
        $region48: #{tpu_custom_call.1} parent=27 // pred_fallthru
          _
      $region28: #{tpu_custom_call.1} parent=5 // pred_fallthru
        _
      %p416 = scmp.le.s32.totalorder 2, %s15
      // Predicated region
      $region49: #{tpu_custom_call.1} parent=5 // pred_check
        %p417 = pneg %p416
      $region50: #{tpu_custom_call.1} parent=5 // pred_check_branch
        %419 = sbr.rel (%p417) target = $region52
      $region51: #{tpu_custom_call.1} parent=5 // pred_region
        %s420 = ssub.s32 %s15, 2
        // Predicated region
        $region53: #{tpu_custom_call.1} parent=51 // pred_check
          %p421 = pneg %p121
        $region54: #{tpu_custom_call.1} parent=51 // pred_check_branch
          %423 = sbr.rel (%p421) target = $region56
        $region55: #{tpu_custom_call.1} parent=51 // pred_region
          %s424 = sand.u32 %s106, 1
          %s425 = scalar_lea.sflag [#allocation5], %s424
          %s426 = sand.u32 %s106, 1
          %s427 = smul.addr %s426, 16
          %s428 = scalar_lea.vmem [#allocation8], %s427
          %429 = dma.done %s425, 256
        $region56: #{tpu_custom_call.1} parent=51 // pred_fallthru
          _
      $region52: #{tpu_custom_call.1} parent=5 // pred_fallthru
        _
    $region6: #{tpu_custom_call.1} parent=1 // loop_footer
      %s19 = sadd.s32 1, %s15
    $region7: #{tpu_custom_call.1} parent=1 // loop_footer_branch
      %14 = sbr.rel target = $region3
    $region8: #{tpu_custom_call.1} parent=1 // loop_exit
      _
    %430 = vsyncpa [#allocation4], 1
    %s431 = scalar_lea.sflag [#allocation4], 1
    %432 = vsyncpa %s431, 1
    %433 = vsyncpa [#allocation7], 1
    %s434 = scalar_lea.sflag [#allocation7], 1
    %435 = vsyncpa %s434, 1
    %436 = vsyncpa [#allocation5], 1
    %s437 = scalar_lea.sflag [#allocation5], 1
    %438 = vsyncpa %s437, 1

</llo_original>
